<compile_context>
chip_gen: v6e
topology: v6e:2x2x1
jax: 0.10.0
libtpu: 0.0.40
codegen_flags: <defaults>
</compile_context>

<pallas_src>
import jax
import jax.numpy as jnp
from jax.experimental import pallas as pl
from jax.experimental.pallas import tpu as pltpu

_LANE = 128
_K = 10          # number of trailing features averaged (fixed by the module)
_MAX_TB = 4096   # batch-tile cap (keeps buffered VMEM well under v5e's 16 MiB)


def _average_kernel(x_ref, o_ref):
    # x_ref: (TB, KW) lane-aligned tail block of the flattened input.
    # o_ref: (TB, 1) per-row mean of the last 10 features.
    x = x_ref[...].astype(jnp.float32)                      # f32 accumulation
    kw = x.shape[1]                                         # static Python int
    # Predicated reduce over the aligned tile instead of an unaligned -10: slice.
    lane = jax.lax.broadcasted_iota(jnp.int32, x.shape, 1)
    masked = jnp.where(lane >= kw - _K, x, 0.0)
    sums = jnp.sum(masked, axis=1, keepdims=True) * (1.0 / _K)   # (TB, 1) f32
    o_ref[...] = sums.astype(o_ref.dtype)


def _pick_batch_tile(B):
    """Batch tile: >=2 grid steps for B>=16 (megacore), capped for VMEM."""
    if B < 16:
        return B  # tiny batch: one step; sharding not worth the extra step
    half = -(-B // 2)             # cdiv(B, 2): at least 2 grid steps
    half = -(-half // 8) * 8      # round up to a sublane multiple (8)
    return min(half, _MAX_TB)


def _make_input_spec(TB, kw, last_col_block, num_steps):
    idx_map = lambda i: (i, last_col_block)
    # Deeper (triple) buffering only pays off when there are >= 3 grid steps.
    if num_steps >= 3 and hasattr(pl, "Buffered"):
        try:
            return pl.BlockSpec((TB, kw), idx_map, pipeline_mode=pl.Buffered(3))
        except TypeError:
            pass  # older jax without pipeline_mode: fall back to default (2)
    return pl.BlockSpec((TB, kw), idx_map)


def average_forward(x, n_predictions):
    """JAX/Pallas equivalent of Average(n_predictions)(x) for NCHW input x."""
    B = x.shape[0]
    x_flat = x.reshape(B, -1)                  # glue: same as torch .view(B, -1)
    L = x_flat.shape[1]

    if L >= _LANE and L % _LANE == 0:
        # No wrapper copy: feed the full slab, but the BlockSpec only DMAs the
        # LAST 128-wide lane block of each batch tile.
        x_in = x_flat
        kw = _LANE
        last_col_block = L // _LANE - 1
    else:
        # Non-lane-aligned L: slice the tail once in the wrapper.  This is a
        # tiny (B, <=128) HBM round trip; kept instead of allow_input_fusion
        # for robustness of the lowering.
        kw = min(L, _LANE)
        x_in = jax.lax.slice_in_dim(x_flat, L - kw, L, axis=1)
        last_col_block = 0

    TB = _pick_batch_tile(B)
    num_steps = pl.cdiv(B, TB)
    grid = (num_steps,)

    in_itemsize = jnp.dtype(x_in.dtype).itemsize
    out_itemsize = jnp.dtype(x_flat.dtype).itemsize
    cost = pl.CostEstimate(
        flops=2 * B * kw,
        transcendentals=0,
        bytes_accessed=B * kw * in_itemsize + B * out_itemsize,
    )

    mean = pl.pallas_call(
        _average_kernel,
        out_shape=jax.ShapeDtypeStruct((B, 1), x_flat.dtype),
        grid_spec=pltpu.PrefetchScalarGridSpec(
            num_scalar_prefetch=0,
            grid=grid,
            in_specs=[_make_input_spec(TB, kw, last_col_block, num_steps)],
            out_specs=pl.BlockSpec((TB, 1), lambda i: (i, 0)),
        ),
        compiler_params=pltpu.CompilerParams(
            dimension_semantics=("parallel",)),   # batch axis: megacore-shardable
        cost_estimate=cost,
    )(x_in)

    # glue: torch sums.repeat(n_predictions, 1).transpose(1, 0) == broadcast,
    # then .squeeze() drops size-1 dims.
    preds = jnp.broadcast_to(mean, (B, n_predictions))
    return jnp.squeeze(preds)


def _ref_forward(x, n_predictions):
    """Plain-JAX reference with the same math as the PyTorch module."""
    B = x.shape[0]
    xf = x.reshape(B, -1).astype(jnp.float32)
    s = (jnp.sum(xf[:, -_K:], axis=1) / float(_K)).astype(x.dtype)
    return jnp.squeeze(jnp.broadcast_to(s[:, None], (B, n_predictions)))


if __name__ == "__main__":
    key = jax.random.PRNGKey(0)
    n_predictions = 5
    k1, k2, k3 = jax.random.split(key, 3)

    # 1) Primary shape from the spec: B=2, C=4, H=16, W=16 -> L=1024 (aligned).
    x1 = jax.random.normal(k1, (2, 4, 16, 16), dtype=jnp.float32)
    out1 = jax.block_until_ready(average_forward(x1, n_predictions))
    ref1 = _ref_forward(x1, n_predictions)
    assert out1.shape == ref1.shape
    assert jnp.allclose(out1, ref1, atol=1e-5, rtol=1e-5), "mismatch (aligned L)"

    # 2) Non-lane-aligned L fallback path: L = 3*5*7 = 105.
    x2 = jax.random.normal(k2, (5, 3, 5, 7), dtype=jnp.float32)
    out2 = jax.block_until_ready(average_forward(x2, n_predictions))
    ref2 = _ref_forward(x2, n_predictions)
    assert out2.shape == ref2.shape
    assert jnp.allclose(out2, ref2, atol=1e-5, rtol=1e-5), "mismatch (unaligned L)"

    # 3) Uneven batch (B=18 -> TB=16, 2 grid steps, masked partial last tile).
    x3 = jax.random.normal(k3, (18, 1, 4, 32), dtype=jnp.float32)
    out3 = jax.block_until_ready(average_forward(x3, n_predictions))
    ref3 = _ref_forward(x3, n_predictions)
    assert out3.shape == ref3.shape
    assert jnp.allclose(out3, ref3, atol=1e-5, rtol=1e-5), "mismatch (uneven B)"

    print("KERNEL_OK")
</pallas_src>

<mosaic_0001>
module attributes {stable_mosaic.version = 11 : i64} {
  func.func @_average_kernel(%arg0: i32, %arg1: memref<2x128xf32, #tpu.memory_space<vmem>>, %arg2: memref<2x1xf32, #tpu.memory_space<vmem>>) attributes {dimension_semantics = [#tpu.dimension_semantics<parallel>], iteration_bounds = array<i64: 1>, scalar_prefetch = 0 : i64, scratch_operands = 0 : i64, tpu.core_type = #tpu.core_type<tc>, window_params = [{transform_indices = @transform_0, window_bounds = array<i64: 2, 128>}, {transform_indices = @transform_1, window_bounds = array<i64: 2, 1>}]} {
    %c0 = arith.constant 0 : index
    %c0_0 = arith.constant 0 : index
    %0 = vector.load %arg1[%c0, %c0_0] : memref<2x128xf32, #tpu.memory_space<vmem>>, vector<2x128xf32>
    %1 = tpu.iota {dimensions = array<i32: 1>} : vector<2x128xi32>
    %c118_i32 = arith.constant 118 : i32
    %2 = vector.broadcast %c118_i32 : i32 to vector<2x128xi32>
    %3 = arith.cmpi sge, %1, %2 : vector<2x128xi32>
    %cst = arith.constant 0.000000e+00 : f32
    %4 = vector.broadcast %cst : f32 to vector<2x128xf32>
    %5 = arith.select %3, %0, %4 : vector<2x128xi1>, vector<2x128xf32>
    %cst_1 = arith.constant dense<0.000000e+00> : vector<2xf32>
    %6 = vector.multi_reduction <add>, %5, %cst_1 [1] : vector<2x128xf32> to vector<2xf32>
    %7 = vector.shape_cast %6 : vector<2xf32> to vector<2x1xf32>
    %cst_2 = arith.constant 1.000000e-01 : f32
    %8 = vector.broadcast %cst_2 : f32 to vector<2x1xf32>
    %9 = arith.mulf %7, %8 : vector<2x1xf32>
    %c0_3 = arith.constant 0 : index
    %c0_4 = arith.constant 0 : index
    %10 = vector.load %arg2[%c0_3, %c0_4] : memref<2x1xf32, #tpu.memory_space<vmem>>, vector<2x1xf32>
    tpu.vector_store %arg2[%c0_3, %c0_4], %9 {strides = array<i32>} : memref<2x1xf32, #tpu.memory_space<vmem>>, vector<2x1xf32>,
    return
  }
  func.func @transform_0(%arg0: i32) -> (i32, i32) {
    %c7_i32 = arith.constant 7 : i32
    %c0_i32 = arith.constant 0 : i32
    return %arg0, %c7_i32 : i32, i32
  }
  func.func @transform_1(%arg0: i32) -> (i32, i32) {
    %c0_i32 = arith.constant 0 : i32
    %c0_i32_0 = arith.constant 0 : i32
    return %arg0, %c0_i32 : i32, i32
  }
}

</mosaic_0001>

<llo_original>
// kernel: tpu_custom_call.1
$region0: #{tpu_custom_call.1}
  #allocation0 [shape = 'u32[]', space=smem, size = 0x4, offset = 0x4, fixed_abs, tag = 'smem constant byte address 0x4 - core index']
  #allocation1 [shape = 'u32[144,128]{1,0:T(1,128)}', space=vmem, size = 0x12000, scoped, tag = 'internal scratch']
  %s0 = inlined_call_operand.hbm [shape: f32[2,1024], index: 0, kind: input, shape index: {}]
  %s1 = inlined_call_operand.vmem [shape: f32[2,1], index: 1, kind: output, shape index: {}]
  %s2 = sld [smem:[#allocation0]]
  $region18: #{tpu_custom_call.1} parent=0
    _
  %s4 = ssub.s32 1, %s2
  %s5 = scalar_select 0, %s4, %s2
  $region1: #{tpu_custom_call.1} parent=0
    #allocation2 [shape = 'u8[1024]{0}', space=vmem, size = 0x400, scoped, tag = 'input window, operand 0, single buffered']
    #allocation3 [shape = 's32[1]{0}', space=sflag, size = 0x4, scoped, tag = 'scoped memory for tpu_custom_call.1']
    %6 = vsyncpa [#allocation3], 0
    // Predicated region
    $region2: #{tpu_custom_call.1} parent=1 // pred_check
      _
    $region3: #{tpu_custom_call.1} parent=1 // pred_check_branch
      %8 = sbr.rel (0) target = $region5
    $region4: #{tpu_custom_call.1} parent=1 // pred_region
      %s10 = ssub.s32 32, 32
      %11 = vsyncadd [#allocation3], %s10
      %s12 = scalar_lea.hbm %s0, 224
      %s14 = sshll.u32 [#allocation2], 4
      %s15 = int_to_ptr.vmem [resolvable:$true] %s14
      %17 = dma.hbm_to_vmem [thread:$0]  %s12, 32, %s15, [#allocation3]
    $region5: #{tpu_custom_call.1} parent=1 // pred_fallthru
      _
    // Predicated region
    $region6: #{tpu_custom_call.1} parent=1 // pred_check
      _
    $region7: #{tpu_custom_call.1} parent=1 // pred_check_branch
      %19 = sbr.rel (0) target = $region9
    $region8: #{tpu_custom_call.1} parent=1 // pred_region
      %20 = dma.done [#allocation3], 32
    $region9: #{tpu_custom_call.1} parent=1 // pred_fallthru
      _
    %v21 = vld [vmem:[#allocation2] sm:$0x3]
    %v22 = vlaneseq
    %v23 = vand.u32 %v22, 127
    %vm24 = vcmp.ge.s32.totalorder %v23, 118
    %v25 = vsel %vm24, %v21, 0.0
    %vm26 = vcmask 1041408
    %v27 = vsel %vm26, %v25, 0.0
    %28 = vadd.xlane.f32.xlu0 %v27
    %v29 = vpop.xlane.xlu0 %28
    %v30 = vmul.f32 %v29, 0.1
    %vm31 = vcmask 1024
    %32 = vst.msk [vmem:[%s1] sm:$0x3] %vm31, %v30
    // Predicated region
    $region10: #{tpu_custom_call.1} parent=1 // pred_check
      _
    $region11: #{tpu_custom_call.1} parent=1 // pred_check_branch
      %34 = sbr.rel (0) target = $region13
    $region12: #{tpu_custom_call.1} parent=1 // pred_region
      _
    $region13: #{tpu_custom_call.1} parent=1 // pred_fallthru
      _
    // Predicated region
    $region14: #{tpu_custom_call.1} parent=1 // pred_check
      _
    $region15: #{tpu_custom_call.1} parent=1 // pred_check_branch
      %36 = sbr.rel (0) target = $region17
    $region16: #{tpu_custom_call.1} parent=1 // pred_region
      _
    $region17: #{tpu_custom_call.1} parent=1 // pred_fallthru
      _
    %37 = vsyncpa [#allocation3], 1

</llo_original>
